<compile_context>
chip_gen: v5e
topology: v5e:2x2
jax: 0.10.0
libtpu: 0.0.40
codegen_flags: <defaults>
</compile_context>

<pallas_src>
import jax
import jax.numpy as jnp
from jax.experimental import pallas as pl
from jax.experimental.pallas import tpu as pltpu


def _round_up(x, m):
    return ((x + m - 1) // m) * m


# ---------------------------------------------------------------------------
# Kernel
# ---------------------------------------------------------------------------
def autoencoder_kernel(x_ref,
                       w1_ref, b1_ref,      # input  -> hidden       (encoder L1)
                       w23c_ref, b23c_ref,  # hidden -> [latent | folded hidden]
                       w4_ref, b4_ref,      # hidden -> input        (decoder L2)
                       recon_ref, latent_ref):
    """One batch row-block of the fused autoencoder forward.

    w23c = concat([w2, w2 @ w3], axis=1); b23c = concat([b2, b2 @ w3 + b3], axis=1)
    (there is no nonlinearity between encoder Linear2 and decoder Linear1, so the
    latent output and the latent->hidden projection share one wide MXU push).
    """
    l_p = latent_ref.shape[-1]
    x = x_ref[...]                                               # (bm, d_p)

    # Encoder layer 1 + ReLU (f32 accumulate, bias/ReLU in f32).
    h1 = jnp.dot(x, w1_ref[...], preferred_element_type=jnp.float32) + b1_ref[...]
    h1 = jnp.maximum(h1, 0.0).astype(x.dtype)                    # (bm, h_p)

    # Single wide-N MXU push: [latent | folded latent->hidden].
    mid = jnp.dot(h1, w23c_ref[...], preferred_element_type=jnp.float32) + b23c_ref[...]
    latent = mid[:, :l_p]                                        # exact module latent
    h2 = jnp.maximum(mid[:, l_p:], 0.0).astype(x.dtype)          # (bm, h_p)

    # Decoder output layer.
    recon = jnp.dot(h2, w4_ref[...], preferred_element_type=jnp.float32) + b4_ref[...]

    recon_ref[...] = recon.astype(recon_ref.dtype)
    latent_ref[...] = latent.astype(latent_ref.dtype)


# ---------------------------------------------------------------------------
# One-time weight preparation (hoisted out of the forward hot path)
# ---------------------------------------------------------------------------
def prepare_params(params, *, compute_dtype=jnp.bfloat16, lane_multiple=128):
    """Fold, pad and cast weights once; reuse across forward calls.

    Weights are (in_features, out_features); biases are (1, out_features); f32 in.
    `lane_multiple`: 128 is always legal; 256 can feed the v6e/v7x 256-wide MXU
    better for production-size dims.
    """
    (w1, b1), (w2, b2), (w3, b3), (w4, b4) = params
    input_dim, hidden_dim = w1.shape
    latent_dim = w2.shape[1]

    f32 = jnp.float32
    # Fold the nonlinearity-free encoder-L2 / decoder-L1 pair in f32.
    w23 = w2.astype(f32) @ w3.astype(f32)
    b23 = b2.astype(f32) @ w3.astype(f32) + b3.astype(f32)

    d_p = _round_up(input_dim, lane_multiple)
    h_p = _round_up(hidden_dim, lane_multiple)
    l_p = _round_up(latent_dim, lane_multiple)

    def pad2(a, rows, cols):
        return jnp.pad(a, ((0, rows - a.shape[0]), (0, cols - a.shape[1])))

    w1p = pad2(w1.astype(f32), d_p, h_p).astype(compute_dtype)
    w4p = pad2(w4.astype(f32), h_p, d_p).astype(compute_dtype)
    # Latent head and folded latent->hidden concatenated along N.
    w23c = jnp.concatenate([pad2(w2.astype(f32), h_p, l_p),
                            pad2(w23, h_p, h_p)], axis=1).astype(compute_dtype)
    b1p = pad2(b1.astype(f32), 1, h_p)
    b4p = pad2(b4.astype(f32), 1, d_p)
    b23c = jnp.concatenate([pad2(b2.astype(f32), 1, l_p),
                            pad2(b23, 1, h_p)], axis=1)

    return dict(
        w1p=w1p, b1p=b1p, w23c=w23c, b23c=b23c, w4p=w4p, b4p=b4p,
        dims=(int(input_dim), int(hidden_dim), int(latent_dim)),
        padded_dims=(d_p, h_p, l_p),
        compute_dtype=jnp.dtype(compute_dtype),
    )


def _vmem_budget_bytes():
    # ~3/4 of physical VMEM: ~96 MiB on v5e/v6e (128 MiB), ~48 MiB on v7x (64 MiB),
    # leaving headroom for compiler-internal scratch.
    try:
        cap = int(pltpu.get_tpu_info().vmem_capacity_bytes)
    except Exception:
        cap = 64 * 1024 * 1024
    return (cap * 3) // 4


# ---------------------------------------------------------------------------
# Forward pass
# ---------------------------------------------------------------------------
def time_series_autoencoder_prepared(x, prepared, *, block_m=512):
    """Forward with pre-prepared weights. Returns (reconstructed, latent)."""
    input_dim, hidden_dim, latent_dim = prepared["dims"]
    d_p, h_p, l_p = prepared["padded_dims"]
    compute_dtype = prepared["compute_dtype"]
    out_dtype = x.dtype
    batch = x.shape[0]
    assert x.shape[1] == input_dim

    cd_b = compute_dtype.itemsize
    out_b = jnp.dtype(out_dtype).itemsize
    budget = _vmem_budget_bytes()

    # Resident (single-buffered) weights + biases.
    weight_bytes = ((d_p * h_p + h_p * (l_p + h_p) + h_p * d_p) * cd_b
                    + (h_p + (l_p + h_p) + d_p) * 4)
    if weight_bytes > budget // 2:
        # TODO(synk): add a K-tiled (hidden-dim 'arbitrary' grid axis) fallback for
        # models whose resident weights do not fit in VMEM (matters first on v7x).
        raise ValueError(
            f"resident-weight layout needs {weight_bytes} B but VMEM budget is {budget} B")

    # Row block: aligned to the compute dtype's sublane pack (bf16 -> 16, f32 -> 8),
    # >=2 grid steps when the batch allows (v7x megacore), capped at block_m and
    # shrunk if per-block buffers would overflow the budget.
    pack = max(8, 32 // cd_b)
    bm = max(pack, min(block_m, _round_up(-(-batch // 2), pack)))

    def block_bytes(bm_):
        io = 2 * bm_ * (d_p * cd_b + d_p * out_b + l_p * out_b)   # double-buffered tiles
        temps = bm_ * (h_p + (l_p + h_p) + h_p + d_p) * 4         # f32 intermediates
        return io + temps

    while bm > pack and weight_bytes + block_bytes(bm) > budget:
        bm = max(pack, _round_up(bm // 2, pack))

    m_p = _round_up(batch, bm)
    grid = (m_p // bm,)
    xp = jnp.pad(x, ((0, m_p - batch), (0, d_p - input_dim))).astype(compute_dtype)

    vmem_limit = int(min(budget, max(16 * 1024 * 1024,
                                     2 * (weight_bytes + block_bytes(bm)))))

    flops = 2 * m_p * (d_p * h_p + h_p * (l_p + h_p) + h_p * d_p)
    bytes_accessed = m_p * d_p * cd_b + m_p * (d_p + l_p) * out_b + weight_bytes
    cost = pl.CostEstimate(flops=flops, transcendentals=0, bytes_accessed=bytes_accessed)

    def row_spec(n):
        return pl.BlockSpec((bm, n), lambda i: (i, 0))            # tiled over batch

    def weight_spec(shape, buffering):
        if buffering is None:
            return pl.BlockSpec(shape, lambda i: (0, 0))          # default buffering
        # Constant block index -> single buffer; no wasted second VMEM copy.
        return pl.BlockSpec(shape, lambda i: (0, 0), pipeline_mode=buffering)

    def run(buffering):
        return pl.pallas_call(
            autoencoder_kernel,
            out_shape=(
                jax.ShapeDtypeStruct((m_p, d_p), out_dtype),
                jax.ShapeDtypeStruct((m_p, l_p), out_dtype),
            ),
            grid=grid,
            in_specs=[
                row_spec(d_p),
                weight_spec(prepared["w1p"].shape, buffering),
                weight_spec(prepared["b1p"].shape, buffering),
                weight_spec(prepared["w23c"].shape, buffering),
                weight_spec(prepared["b23c"].shape, buffering),
                weight_spec(prepared["w4p"].shape, buffering),
                weight_spec(prepared["b4p"].shape, buffering),
            ],
            out_specs=(row_spec(d_p), row_spec(l_p)),
            compiler_params=pltpu.CompilerParams(
                dimension_semantics=("parallel",),
                vmem_limit_bytes=vmem_limit,
            ),
            cost_estimate=cost,
        )(xp, prepared["w1p"], prepared["b1p"], prepared["w23c"], prepared["b23c"],
          prepared["w4p"], prepared["b4p"])

    try:
        recon_p, latent_p = run(pl.Buffered(1))
    except Exception:
        # Fallback for JAX versions whose top-level pipeline rejects buffer_count=1.
        recon_p, latent_p = run(None)

    return recon_p[:batch, :input_dim], latent_p[:batch, :latent_dim]


def time_series_autoencoder(x, params, *, compute_dtype=jnp.bfloat16,
                            block_m=512, lane_multiple=128):
    """Convenience one-shot forward. For inference loops, call prepare_params()
    once and reuse time_series_autoencoder_prepared()."""
    prepared = prepare_params(params, compute_dtype=compute_dtype,
                              lane_multiple=lane_multiple)
    return time_series_autoencoder_prepared(x, prepared, block_m=block_m)


# ---------------------------------------------------------------------------
# Parameter init (deterministic, PyTorch-like Linear init)
# ---------------------------------------------------------------------------
def init_params(key, input_dim, hidden_dim, latent_dim):
    """Weights stored as (in, out); biases as (1, out); all f32."""
    ks = jax.random.split(key, 8)

    def linear(kw, kb, fan_in, fan_out):
        bound = 1.0 / jnp.sqrt(jnp.float32(fan_in))
        w = jax.random.uniform(kw, (fan_in, fan_out), jnp.float32, -bound, bound)
        b = jax.random.uniform(kb, (1, fan_out), jnp.float32, -bound, bound)
        return w, b

    p1 = linear(ks[0], ks[1], input_dim, hidden_dim)
    p2 = linear(ks[2], ks[3], hidden_dim, latent_dim)
    p3 = linear(ks[4], ks[5], latent_dim, hidden_dim)
    p4 = linear(ks[6], ks[7], hidden_dim, input_dim)
    return (p1, p2, p3, p4)


if __name__ == "__main__":
    batch, input_dim, hidden_dim, latent_dim = 8, 16, 64, 8

    key = jax.random.PRNGKey(0)
    k_x, k_p = jax.random.split(key)
    x = jax.random.normal(k_x, (batch, input_dim), jnp.float32)
    params = init_params(k_p, input_dim, hidden_dim, latent_dim)

    # Plain-JAX f32 reference (unfolded, exactly like the PyTorch module).
    (w1, b1), (w2, b2), (w3, b3), (w4, b4) = params
    h1 = jnp.maximum(x @ w1 + b1, 0.0)
    latent_ref = h1 @ w2 + b2
    h2 = jnp.maximum(latent_ref @ w3 + b3, 0.0)
    recon_ref = h2 @ w4 + b4

    # f32 compute path: folding only reorders f32 sums -> tight tolerance.
    prep32 = prepare_params(params, compute_dtype=jnp.float32)
    recon32, latent32 = time_series_autoencoder_prepared(x, prep32)
    jax.block_until_ready((recon32, latent32))
    assert recon32.shape == (batch, input_dim) and latent32.shape == (batch, latent_dim)
    assert jnp.allclose(latent32, latent_ref, atol=1e-5, rtol=1e-5)
    assert jnp.allclose(recon32, recon_ref, atol=1e-4, rtol=1e-4)

    # bf16 compute path (default, throughput): loose tolerance.
    prep16 = prepare_params(params)            # prepared once, reused across calls
    recon16, latent16 = time_series_autoencoder_prepared(x, prep16)
    jax.block_until_ready((recon16, latent16))
    assert recon16.shape == (batch, input_dim) and latent16.shape == (batch, latent_dim)
    assert jnp.allclose(latent16, latent_ref, atol=5e-2, rtol=5e-2)
    assert jnp.allclose(recon16, recon_ref, atol=5e-2, rtol=5e-2)

    print("KERNEL_OK")
</pallas_src>

<mosaic_0001>
module attributes {stable_mosaic.version = 11 : i64} {
  func.func @autoencoder_kernel(%arg0: i32, %arg1: memref<8x128xf32, #tpu.memory_space<vmem>>, %arg2: memref<128x128xf32, #tpu.memory_space<vmem>>, %arg3: memref<1x128xf32, #tpu.memory_space<vmem>>, %arg4: memref<128x256xf32, #tpu.memory_space<vmem>>, %arg5: memref<1x256xf32, #tpu.memory_space<vmem>>, %arg6: memref<128x128xf32, #tpu.memory_space<vmem>>, %arg7: memref<1x128xf32, #tpu.memory_space<vmem>>, %arg8: memref<8x128xf32, #tpu.memory_space<vmem>>, %arg9: memref<8x128xf32, #tpu.memory_space<vmem>>) attributes {dimension_semantics = [#tpu.dimension_semantics<parallel>], iteration_bounds = array<i64: 1>, scalar_prefetch = 0 : i64, scratch_operands = 0 : i64, tpu.core_type = #tpu.core_type<tc>, window_params = [{transform_indices = @transform_0, window_bounds = array<i64: 8, 128>}, {pipeline_mode = #tpu.pipeline_mode<synchronous>, transform_indices = @transform_1, window_bounds = array<i64: 128, 128>}, {pipeline_mode = #tpu.pipeline_mode<synchronous>, transform_indices = @transform_2, window_bounds = array<i64: 1, 128>}, {pipeline_mode = #tpu.pipeline_mode<synchronous>, transform_indices = @transform_3, window_bounds = array<i64: 128, 256>}, {pipeline_mode = #tpu.pipeline_mode<synchronous>, transform_indices = @transform_4, window_bounds = array<i64: 1, 256>}, {pipeline_mode = #tpu.pipeline_mode<synchronous>, transform_indices = @transform_5, window_bounds = array<i64: 128, 128>}, {pipeline_mode = #tpu.pipeline_mode<synchronous>, transform_indices = @transform_6, window_bounds = array<i64: 1, 128>}, {transform_indices = @transform_7, window_bounds = array<i64: 8, 128>}, {transform_indices = @transform_8, window_bounds = array<i64: 8, 128>}]} {
    %c0 = arith.constant 0 : index
    %c0_0 = arith.constant 0 : index
    %0 = vector.load %arg1[%c0, %c0_0] : memref<8x128xf32, #tpu.memory_space<vmem>>, vector<8x128xf32>
    %c0_1 = arith.constant 0 : index
    %c0_2 = arith.constant 0 : index
    %1 = vector.load %arg2[%c0_1, %c0_2] : memref<128x128xf32, #tpu.memory_space<vmem>>, vector<128x128xf32>
    %cst = arith.constant dense<0.000000e+00> : vector<8x128xf32>
    %2 = tpu.matmul %0, %1, %cst {dimension_numbers = #tpu.dot_dimension_numbers<[1], [0], [0], [1], [0, 0, 1, 1], [], []>} : vector<8x128xf32>, vector<128x128xf32>, vector<8x128xf32> -> vector<8x128xf32>
    %c0_3 = arith.constant 0 : index
    %c0_4 = arith.constant 0 : index
    %3 = vector.load %arg3[%c0_3, %c0_4] : memref<1x128xf32, #tpu.memory_space<vmem>>, vector<1x128xf32>
    %4 = vector.broadcast %3 : vector<1x128xf32> to vector<8x128xf32>
    %5 = arith.addf %2, %4 : vector<8x128xf32>
    %cst_5 = arith.constant 0.000000e+00 : f32
    %6 = vector.broadcast %cst_5 : f32 to vector<8x128xf32>
    %7 = arith.maximumf %5, %6 : vector<8x128xf32>
    %c0_6 = arith.constant 0 : index
    %c0_7 = arith.constant 0 : index
    %8 = vector.load %arg4[%c0_6, %c0_7] : memref<128x256xf32, #tpu.memory_space<vmem>>, vector<128x256xf32>
    %cst_8 = arith.constant dense<0.000000e+00> : vector<8x256xf32>
    %9 = tpu.matmul %7, %8, %cst_8 {dimension_numbers = #tpu.dot_dimension_numbers<[1], [0], [0], [1], [0, 0, 1, 1], [], []>} : vector<8x128xf32>, vector<128x256xf32>, vector<8x256xf32> -> vector<8x256xf32>
    %c0_9 = arith.constant 0 : index
    %c0_10 = arith.constant 0 : index
    %10 = vector.load %arg5[%c0_9, %c0_10] : memref<1x256xf32, #tpu.memory_space<vmem>>, vector<1x256xf32>
    %11 = vector.broadcast %10 : vector<1x256xf32> to vector<8x256xf32>
    %12 = arith.addf %9, %11 : vector<8x256xf32>
    %13 = vector.extract_strided_slice %12 {offsets = [0, 0], sizes = [8, 128], strides = [1, 1]} : vector<8x256xf32> to vector<8x128xf32>
    %14 = vector.extract_strided_slice %12 {offsets = [0, 128], sizes = [8, 128], strides = [1, 1]} : vector<8x256xf32> to vector<8x128xf32>
    %cst_11 = arith.constant 0.000000e+00 : f32
    %15 = vector.broadcast %cst_11 : f32 to vector<8x128xf32>
    %16 = arith.maximumf %14, %15 : vector<8x128xf32>
    %c0_12 = arith.constant 0 : index
    %c0_13 = arith.constant 0 : index
    %17 = vector.load %arg6[%c0_12, %c0_13] : memref<128x128xf32, #tpu.memory_space<vmem>>, vector<128x128xf32>
    %cst_14 = arith.constant dense<0.000000e+00> : vector<8x128xf32>
    %18 = tpu.matmul %16, %17, %cst_14 {dimension_numbers = #tpu.dot_dimension_numbers<[1], [0], [0], [1], [0, 0, 1, 1], [], []>} : vector<8x128xf32>, vector<128x128xf32>, vector<8x128xf32> -> vector<8x128xf32>
    %c0_15 = arith.constant 0 : index
    %c0_16 = arith.constant 0 : index
    %19 = vector.load %arg7[%c0_15, %c0_16] : memref<1x128xf32, #tpu.memory_space<vmem>>, vector<1x128xf32>
    %20 = vector.broadcast %19 : vector<1x128xf32> to vector<8x128xf32>
    %21 = arith.addf %18, %20 : vector<8x128xf32>
    %c0_17 = arith.constant 0 : index
    %c0_18 = arith.constant 0 : index
    %22 = vector.load %arg8[%c0_17, %c0_18] : memref<8x128xf32, #tpu.memory_space<vmem>>, vector<8x128xf32>
    tpu.vector_store %arg8[%c0_17, %c0_18], %21 {strides = array<i32>} : memref<8x128xf32, #tpu.memory_space<vmem>>, vector<8x128xf32>,
    %c0_19 = arith.constant 0 : index
    %c0_20 = arith.constant 0 : index
    %23 = vector.load %arg9[%c0_19, %c0_20] : memref<8x128xf32, #tpu.memory_space<vmem>>, vector<8x128xf32>
    tpu.vector_store %arg9[%c0_19, %c0_20], %13 {strides = array<i32>} : memref<8x128xf32, #tpu.memory_space<vmem>>, vector<8x128xf32>,
    return
  }
  func.func @transform_0(%arg0: i32) -> (i32, i32) {
    %c0_i32 = arith.constant 0 : i32
    %c0_i32_0 = arith.constant 0 : i32
    return %arg0, %c0_i32 : i32, i32
  }
  func.func @transform_1(%arg0: i32) -> (i32, i32) {
    %c0_i32 = arith.constant 0 : i32
    %c0_i32_0 = arith.constant 0 : i32
    %c0_i32_1 = arith.constant 0 : i32
    return %c0_i32, %c0_i32_0 : i32, i32
  }
  func.func @transform_2(%arg0: i32) -> (i32, i32) {
    %c0_i32 = arith.constant 0 : i32
    %c0_i32_0 = arith.constant 0 : i32
    %c0_i32_1 = arith.constant 0 : i32
    return %c0_i32, %c0_i32_0 : i32, i32
  }
  func.func @transform_3(%arg0: i32) -> (i32, i32) {
    %c0_i32 = arith.constant 0 : i32
    %c0_i32_0 = arith.constant 0 : i32
    %c0_i32_1 = arith.constant 0 : i32
    return %c0_i32, %c0_i32_0 : i32, i32
  }
  func.func @transform_4(%arg0: i32) -> (i32, i32) {
    %c0_i32 = arith.constant 0 : i32
    %c0_i32_0 = arith.constant 0 : i32
    %c0_i32_1 = arith.constant 0 : i32
    return %c0_i32, %c0_i32_0 : i32, i32
  }
  func.func @transform_5(%arg0: i32) -> (i32, i32) {
    %c0_i32 = arith.constant 0 : i32
    %c0_i32_0 = arith.constant 0 : i32
    %c0_i32_1 = arith.constant 0 : i32
    return %c0_i32, %c0_i32_0 : i32, i32
  }
  func.func @transform_6(%arg0: i32) -> (i32, i32) {
    %c0_i32 = arith.constant 0 : i32
    %c0_i32_0 = arith.constant 0 : i32
    %c0_i32_1 = arith.constant 0 : i32
    return %c0_i32, %c0_i32_0 : i32, i32
  }
  func.func @transform_7(%arg0: i32) -> (i32, i32) {
    %c0_i32 = arith.constant 0 : i32
    %c0_i32_0 = arith.constant 0 : i32
    return %arg0, %c0_i32 : i32, i32
  }
  func.func @transform_8(%arg0: i32) -> (i32, i32) {
    %c0_i32 = arith.constant 0 : i32
    %c0_i32_0 = arith.constant 0 : i32
    return %arg0, %c0_i32 : i32, i32
  }
}

module attributes {stable_mosaic.version = 11 : i64} {
  func.func @autoencoder_kernel(%arg0: i32, %arg1: memref<8x128xf32, #tpu.memory_space<vmem>>, %arg2: memref<128x128xf32, #tpu.memory_space<vmem>>, %arg3: memref<1x128xf32, #tpu.memory_space<vmem>>, %arg4: memref<128x256xf32, #tpu.memory_space<vmem>>, %arg5: memref<1x256xf32, #tpu.memory_space<vmem>>, %arg6: memref<128x128xf32, #tpu.memory_space<vmem>>, %arg7: memref<1x128xf32, #tpu.memory_space<vmem>>, %arg8: memref<8x128xf32, #tpu.memory_space<vmem>>, %arg9: memref<8x128xf32, #tpu.memory_space<vmem>>) attributes {dimension_semantics = [#tpu.dimension_semantics<parallel>], iteration_bounds = array<i64: 1>, scalar_prefetch = 0 : i64, scratch_operands = 0 : i64, tpu.core_type = #tpu.core_type<tc>, window_params = [{transform_indices = @transform_0, window_bounds = array<i64: 8, 128>}, {pipeline_mode = #tpu.pipeline_mode<synchronous>, transform_indices = @transform_1, window_bounds = array<i64: 128, 128>}, {pipeline_mode = #tpu.pipeline_mode<synchronous>, transform_indices = @transform_2, window_bounds = array<i64: 1, 128>}, {pipeline_mode = #tpu.pipeline_mode<synchronous>, transform_indices = @transform_3, window_bounds = array<i64: 128, 256>}, {pipeline_mode = #tpu.pipeline_mode<synchronous>, transform_indices = @transform_4, window_bounds = array<i64: 1, 256>}, {pipeline_mode = #tpu.pipeline_mode<synchronous>, transform_indices = @transform_5, window_bounds = array<i64: 128, 128>}, {pipeline_mode = #tpu.pipeline_mode<synchronous>, transform_indices = @transform_6, window_bounds = array<i64: 1, 128>}, {transform_indices = @transform_7, window_bounds = array<i64: 8, 128>}, {transform_indices = @transform_8, window_bounds = array<i64: 8, 128>}]} {
    %c0 = arith.constant 0 : index
    %c0_0 = arith.constant 0 : index
    %0 = vector.load %arg1[%c0, %c0_0] : memref<8x128xf32, #tpu.memory_space<vmem>>, vector<8x128xf32>
    %c0_1 = arith.constant 0 : index
    %c0_2 = arith.constant 0 : index
    %1 = vector.load %arg2[%c0_1, %c0_2] : memref<128x128xf32, #tpu.memory_space<vmem>>, vector<128x128xf32>
    %cst = arith.constant dense<0.000000e+00> : vector<8x128xf32>
    %2 = tpu.matmul %0, %1, %cst {dimension_numbers = #tpu.dot_dimension_numbers<[1], [0], [0], [1], [0, 0, 1, 1], [], []>} : vector<8x128xf32>, vector<128x128xf32>, vector<8x128xf32> -> vector<8x128xf32>
    %c0_3 = arith.constant 0 : index
    %c0_4 = arith.constant 0 : index
    %3 = vector.load %arg3[%c0_3, %c0_4] : memref<1x128xf32, #tpu.memory_space<vmem>>, vector<1x128xf32>
    %4 = vector.broadcast %3 : vector<1x128xf32> to vector<8x128xf32>
    %5 = arith.addf %2, %4 : vector<8x128xf32>
    %cst_5 = arith.constant 0.000000e+00 : f32
    %6 = vector.broadcast %cst_5 : f32 to vector<8x128xf32>
    %7 = arith.maximumf %5, %6 : vector<8x128xf32>
    %c0_6 = arith.constant 0 : index
    %c0_7 = arith.constant 0 : index
    %8 = vector.load %arg4[%c0_6, %c0_7] : memref<128x256xf32, #tpu.memory_space<vmem>>, vector<128x256xf32>
    %cst_8 = arith.constant dense<0.000000e+00> : vector<8x256xf32>
    %9 = tpu.matmul %7, %8, %cst_8 {dimension_numbers = #tpu.dot_dimension_numbers<[1], [0], [0], [1], [0, 0, 1, 1], [], []>} : vector<8x128xf32>, vector<128x256xf32>, vector<8x256xf32> -> vector<8x256xf32>
    %c0_9 = arith.constant 0 : index
    %c0_10 = arith.constant 0 : index
    %10 = vector.load %arg5[%c0_9, %c0_10] : memref<1x256xf32, #tpu.memory_space<vmem>>, vector<1x256xf32>
    %11 = vector.broadcast %10 : vector<1x256xf32> to vector<8x256xf32>
    %12 = arith.addf %9, %11 : vector<8x256xf32>
    %13 = vector.extract_strided_slice %12 {offsets = [0, 0], sizes = [8, 128], strides = [1, 1]} : vector<8x256xf32> to vector<8x128xf32>
    %14 = vector.extract_strided_slice %12 {offsets = [0, 128], sizes = [8, 128], strides = [1, 1]} : vector<8x256xf32> to vector<8x128xf32>
    %cst_11 = arith.constant 0.000000e+00 : f32
    %15 = vector.broadcast %cst_11 : f32 to vector<8x128xf32>
    %16 = arith.maximumf %14, %15 : vector<8x128xf32>
    %c0_12 = arith.constant 0 : index
    %c0_13 = arith.constant 0 : index
    %17 = vector.load %arg6[%c0_12, %c0_13] : memref<128x128xf32, #tpu.memory_space<vmem>>, vector<128x128xf32>
    %cst_14 = arith.constant dense<0.000000e+00> : vector<8x128xf32>
    %18 = tpu.matmul %16, %17, %cst_14 {dimension_numbers = #tpu.dot_dimension_numbers<[1], [0], [0], [1], [0, 0, 1, 1], [], []>} : vector<8x128xf32>, vector<128x128xf32>, vector<8x128xf32> -> vector<8x128xf32>
    %c0_15 = arith.constant 0 : index
    %c0_16 = arith.constant 0 : index
    %19 = vector.load %arg7[%c0_15, %c0_16] : memref<1x128xf32, #tpu.memory_space<vmem>>, vector<1x128xf32>
    %20 = vector.broadcast %19 : vector<1x128xf32> to vector<8x128xf32>
    %21 = arith.addf %18, %20 : vector<8x128xf32>
    %c0_17 = arith.constant 0 : index
    %c0_18 = arith.constant 0 : index
    %22 = vector.load %arg8[%c0_17, %c0_18] : memref<8x128xf32, #tpu.memory_space<vmem>>, vector<8x128xf32>
    tpu.vector_store %arg8[%c0_17, %c0_18], %21 {strides = array<i32>} : memref<8x128xf32, #tpu.memory_space<vmem>>, vector<8x128xf32>,
    %c0_19 = arith.constant 0 : index
    %c0_20 = arith.constant 0 : index
    %23 = vector.load %arg9[%c0_19, %c0_20] : memref<8x128xf32, #tpu.memory_space<vmem>>, vector<8x128xf32>
    tpu.vector_store %arg9[%c0_19, %c0_20], %13 {strides = array<i32>} : memref<8x128xf32, #tpu.memory_space<vmem>>, vector<8x128xf32>,
    return
  }
  func.func @transform_0(%arg0: i32) -> (i32, i32) {
    %c0_i32 = arith.constant 0 : i32
    %c0_i32_0 = arith.constant 0 : i32
    return %arg0, %c0_i32 : i32, i32
  }
  func.func @transform_1(%arg0: i32) -> (i32, i32) {
    %c0_i32 = arith.constant 0 : i32
    %c0_i32_0 = arith.constant 0 : i32
    %c0_i32_1 = arith.constant 0 : i32
    return %c0_i32, %c0_i32_0 : i32, i32
  }
  func.func @transform_2(%arg0: i32) -> (i32, i32) {
    %c0_i32 = arith.constant 0 : i32
    %c0_i32_0 = arith.constant 0 : i32
    %c0_i32_1 = arith.constant 0 : i32
    return %c0_i32, %c0_i32_0 : i32, i32
  }
  func.func @transform_3(%arg0: i32) -> (i32, i32) {
    %c0_i32 = arith.constant 0 : i32
    %c0_i32_0 = arith.constant 0 : i32
    %c0_i32_1 = arith.constant 0 : i32
    return %c0_i32, %c0_i32_0 : i32, i32
  }
  func.func @transform_4(%arg0: i32) -> (i32, i32) {
    %c0_i32 = arith.constant 0 : i32
    %c0_i32_0 = arith.constant 0 : i32
    %c0_i32_1 = arith.constant 0 : i32
    return %c0_i32, %c0_i32_0 : i32, i32
  }
  func.func @transform_5(%arg0: i32) -> (i32, i32) {
    %c0_i32 = arith.constant 0 : i32
    %c0_i32_0 = arith.constant 0 : i32
    %c0_i32_1 = arith.constant 0 : i32
    return %c0_i32, %c0_i32_0 : i32, i32
  }
  func.func @transform_6(%arg0: i32) -> (i32, i32) {
    %c0_i32 = arith.constant 0 : i32
    %c0_i32_0 = arith.constant 0 : i32
    %c0_i32_1 = arith.constant 0 : i32
    return %c0_i32, %c0_i32_0 : i32, i32
  }
  func.func @transform_7(%arg0: i32) -> (i32, i32) {
    %c0_i32 = arith.constant 0 : i32
    %c0_i32_0 = arith.constant 0 : i32
    return %arg0, %c0_i32 : i32, i32
  }
  func.func @transform_8(%arg0: i32) -> (i32, i32) {
    %c0_i32 = arith.constant 0 : i32
    %c0_i32_0 = arith.constant 0 : i32
    return %arg0, %c0_i32 : i32, i32
  }
}

</mosaic_0001>

<llo_original>
// kernel: tpu_custom_call.1
$region0: #{tpu_custom_call.1}
  #allocation0 [shape = 'u32[]', space=smem, size = 0x4, offset = 0x4, fixed_abs, tag = 'smem constant byte address 0x4 - core index']
  #allocation1 [shape = 'u32[72,128]{1,0:T(1,128)}', space=vmem, size = 0x9000, scoped, tag = 'internal scratch']
  %s0 = inlined_call_operand.hbm [shape: f32[8,128], index: 0, kind: input, shape index: {}]
  %s1 = inlined_call_operand.hbm [shape: f32[128,128], index: 1, kind: input, shape index: {}]
  %s2 = inlined_call_operand.vmem [shape: f32[1,128], index: 2, kind: input, shape index: {}]
  %s3 = inlined_call_operand.hbm [shape: f32[128,256], index: 3, kind: input, shape index: {}]
  %s4 = inlined_call_operand.vmem [shape: f32[1,256], index: 4, kind: input, shape index: {}]
  %s5 = inlined_call_operand.hbm [shape: f32[128,128], index: 5, kind: input, shape index: {}]
  %s6 = inlined_call_operand.vmem [shape: f32[1,128], index: 6, kind: input, shape index: {}]
  %s7 = inlined_call_operand.hbm [shape: f32[8,128], index: 7, kind: output, shape index: {0}]
  %s8 = inlined_call_operand.hbm [shape: f32[8,128], index: 8, kind: output, shape index: {1}]
  %9 = xla_tuple %s7, %s8
  %s10 = sld [smem:[#allocation0]]
  $region62: #{tpu_custom_call.1} parent=0
    _
  %s12 = ssub.s32 1, %s10
  %s13 = scalar_select 0, %s12, %s10
  $region1: #{tpu_custom_call.1} parent=0
    #allocation2 [shape = 'u8[4096]{0}', space=vmem, size = 0x1000, scoped, tag = 'input window, operand 0, single buffered']
    #allocation3 [shape = 's32[1]{0}', space=sflag, size = 0x4, scoped, tag = 'scoped memory for tpu_custom_call.1']
    #allocation4 [shape = 's32[1]{0}', space=sflag, size = 0x4, scoped, tag = 'scoped memory for tpu_custom_call.1']
    #allocation5 [shape = 'u8[65536]{0}', space=vmem, size = 0x10000, scoped, tag = 'input window, operand 1, single buffered']
    #allocation6 [shape = 's32[1]{0}', space=sflag, size = 0x4, scoped, tag = 'scoped memory for tpu_custom_call.1']
    #allocation7 [shape = 'u8[131072]{0}', space=vmem, size = 0x20000, scoped, tag = 'input window, operand 3, single buffered']
    #allocation8 [shape = 'u8[65536]{0}', space=vmem, size = 0x10000, scoped, tag = 'input window, operand 5, single buffered']
    #allocation9 [shape = 's32[1]{0}', space=sflag, size = 0x4, scoped, tag = 'scoped memory for tpu_custom_call.1']
    #allocation10 [shape = 'u8[4096]{0}', space=vmem, size = 0x1000, scoped, tag = 'output window, operand 0, single buffered']
    #allocation11 [shape = 'u8[4096]{0}', space=vmem, size = 0x1000, scoped, tag = 'output window, operand 1, single buffered']
    #allocation12 [shape = 's32[1]{0}', space=sflag, size = 0x4, scoped, tag = 'scoped memory for tpu_custom_call.1']
    %14 = vsyncpa [#allocation3], 0
    %15 = vsyncpa [#allocation6], 0
    %16 = vsyncpa [#allocation9], 0
    %17 = vsyncpa [#allocation4], 0
    %18 = vsyncpa [#allocation12], 0
    // Predicated region
    $region2: #{tpu_custom_call.1} parent=1 // pred_check
      _
    $region3: #{tpu_custom_call.1} parent=1 // pred_check_branch
      %20 = sbr.rel (0) target = $region5
    $region4: #{tpu_custom_call.1} parent=1 // pred_region
      %22 = vsyncadd [#allocation3], 0
      %s24 = sshll.u32 %s0, 4
      %s25 = int_to_ptr.hbm [resolvable:$true] %s24
      %s26 = sshll.u32 [#allocation2], 4
      %s27 = int_to_ptr.vmem [resolvable:$true] %s26
      %29 = dma.hbm_to_vmem [thread:$0]  %s25, 128, %s27, [#allocation3]
    $region5: #{tpu_custom_call.1} parent=1 // pred_fallthru
      _
    // Predicated region
    $region6: #{tpu_custom_call.1} parent=1 // pred_check
      _
    $region7: #{tpu_custom_call.1} parent=1 // pred_check_branch
      %31 = sbr.rel (0) target = $region9
    $region8: #{tpu_custom_call.1} parent=1 // pred_region
      %33 = vsyncadd [#allocation6], 0
      %s34 = sshll.u32 %s1, 4
      %s35 = int_to_ptr.hbm [resolvable:$true] %s34
      %s36 = sshll.u32 [#allocation5], 4
      %s37 = int_to_ptr.vmem [resolvable:$true] %s36
      %42 = dma.hbm_to_vmem [thread:$0]  %s35, 2048, %s37, [#allocation6], 128, 128, 8
    $region9: #{tpu_custom_call.1} parent=1 // pred_fallthru
      _
    // Predicated region
    $region10: #{tpu_custom_call.1} parent=1 // pred_check
      _
    $region11: #{tpu_custom_call.1} parent=1 // pred_check_branch
      %44 = sbr.rel (0) target = $region13
    $region12: #{tpu_custom_call.1} parent=1 // pred_region
      _
    $region13: #{tpu_custom_call.1} parent=1 // pred_fallthru
      _
    // Predicated region
    $region14: #{tpu_custom_call.1} parent=1 // pred_check
      _
    $region15: #{tpu_custom_call.1} parent=1 // pred_check_branch
      %46 = sbr.rel (0) target = $region17
    $region16: #{tpu_custom_call.1} parent=1 // pred_region
      %48 = vsyncadd [#allocation6], 0
      %s49 = sshll.u32 %s3, 4
      %s50 = int_to_ptr.hbm [resolvable:$true] %s49
      %s51 = sshll.u32 [#allocation7], 4
      %s52 = int_to_ptr.vmem [resolvable:$true] %s51
      %57 = dma.hbm_to_vmem [thread:$0]  %s50, 4096, %s52, [#allocation6], 256, 256, 16
    $region17: #{tpu_custom_call.1} parent=1 // pred_fallthru
      _
    // Predicated region
    $region18: #{tpu_custom_call.1} parent=1 // pred_check
      _
    $region19: #{tpu_custom_call.1} parent=1 // pred_check_branch
      %59 = sbr.rel (0) target = $region21
    $region20: #{tpu_custom_call.1} parent=1 // pred_region
      _
    $region21: #{tpu_custom_call.1} parent=1 // pred_fallthru
      _
    // Predicated region
    $region22: #{tpu_custom_call.1} parent=1 // pred_check
      _
    $region23: #{tpu_custom_call.1} parent=1 // pred_check_branch
      %61 = sbr.rel (0) target = $region25
    $region24: #{tpu_custom_call.1} parent=1 // pred_region
      %63 = vsyncadd [#allocation9], 0
      %s64 = sshll.u32 %s5, 4
      %s65 = int_to_ptr.hbm [resolvable:$true] %s64
      %s66 = sshll.u32 [#allocation8], 4
      %s67 = int_to_ptr.vmem [resolvable:$true] %s66
      %72 = dma.hbm_to_vmem [thread:$0]  %s65, 2048, %s67, [#allocation9], 128, 128, 8
    $region25: #{tpu_custom_call.1} parent=1 // pred_fallthru
      _
    // Predicated region
    $region26: #{tpu_custom_call.1} parent=1 // pred_check
      _
    $region27: #{tpu_custom_call.1} parent=1 // pred_check_branch
      %74 = sbr.rel (0) target = $region29
    $region28: #{tpu_custom_call.1} parent=1 // pred_region
      _
    $region29: #{tpu_custom_call.1} parent=1 // pred_fallthru
      _
    // Predicated region
    $region30: #{tpu_custom_call.1} parent=1 // pred_check
      _
    $region31: #{tpu_custom_call.1} parent=1 // pred_check_branch
      %76 = sbr.rel (0) target = $region33
    $region32: #{tpu_custom_call.1} parent=1 // pred_region
      %78 = dma.done [#allocation3], 128
    $region33: #{tpu_custom_call.1} parent=1 // pred_fallthru
      _
    // Predicated region
    $region34: #{tpu_custom_call.1} parent=1 // pred_check
      _
    $region35: #{tpu_custom_call.1} parent=1 // pred_check_branch
      %80 = sbr.rel (0) target = $region37
    $region36: #{tpu_custom_call.1} parent=1 // pred_region
      %82 = dma.done [#allocation6], 2048
    $region37: #{tpu_custom_call.1} parent=1 // pred_fallthru
      _
    // Predicated region
    $region38: #{tpu_custom_call.1} parent=1 // pred_check
      _
    $region39: #{tpu_custom_call.1} parent=1 // pred_check_branch
      %84 = sbr.rel (0) target = $region41
    $region40: #{tpu_custom_call.1} parent=1 // pred_region
      %86 = dma.done [#allocation6], 4096
    $region41: #{tpu_custom_call.1} parent=1 // pred_fallthru
      _
    // Predicated region
    $region42: #{tpu_custom_call.1} parent=1 // pred_check
      _
    $region43: #{tpu_custom_call.1} parent=1 // pred_check_branch
      %88 = sbr.rel (0) target = $region45
    $region44: #{tpu_custom_call.1} parent=1 // pred_region
      %90 = dma.done [#allocation9], 2048
    $region45: #{tpu_custom_call.1} parent=1 // pred_fallthru
      _
    %v91 = vld [vmem:[#allocation2] sm:$0xff]
    %v92 = vld [vmem:[#allocation5] sm:$0xff]
    %v93 = vld [vmem:[#allocation5 + $0x8] sm:$0xff]
    %v94 = vld [vmem:[#allocation5 + $0x10] sm:$0xff]
    %v95 = vld [vmem:[#allocation5 + $0x18] sm:$0xff]
    %v96 = vld [vmem:[#allocation5 + $0x20] sm:$0xff]
    %v97 = vld [vmem:[#allocation5 + $0x28] sm:$0xff]
    %v98 = vld [vmem:[#allocation5 + $0x30] sm:$0xff]
    %v99 = vld [vmem:[#allocation5 + $0x38] sm:$0xff]
    %v100 = vld [vmem:[#allocation5 + $0x40] sm:$0xff]
    %v101 = vld [vmem:[#allocation5 + $0x48] sm:$0xff]
    %v102 = vld [vmem:[#allocation5 + $0x50] sm:$0xff]
    %v103 = vld [vmem:[#allocation5 + $0x58] sm:$0xff]
    %v104 = vld [vmem:[#allocation5 + $0x60] sm:$0xff]
    %v105 = vld [vmem:[#allocation5 + $0x68] sm:$0xff]
    %v106 = vld [vmem:[#allocation5 + $0x70] sm:$0xff]
    %v107 = vld [vmem:[#allocation5 + $0x78] sm:$0xff]
    %v108 = vld [vmem:[%s2] sm:$0x1]
    %v110 = vperm.slane %v108, 0
    %112 = vmatpush.msra.mxu0 %v107
    %113 = vmatpush.msra.mxu0 %v106
    %114 = vmatpush.msra.mxu0 %v105
    %115 = vmatpush.msra.mxu0 %v104
    %116 = vmatpush.msra.mxu0 %v103
    %117 = vmatpush.msra.mxu0 %v102
    %118 = vmatpush.msra.mxu0 %v101
    %119 = vmatpush.msra.mxu0 %v100
    %120 = vmatpush.msra.mxu0 %v99
    %121 = vmatpush.msra.mxu0 %v98
    %122 = vmatpush.msra.mxu0 %v97
    %123 = vmatpush.msra.mxu0 %v96
    %124 = vmatpush.msra.mxu0 %v95
    %125 = vmatpush.msra.mxu0 %v94
    %126 = vmatpush.msra.mxu0 %v93
    %127 = vmatpush.msra.mxu0 %v92
    %128 = vmatmul.f32.gmra.mxu0 %v91
    %v129 = vpop.f32.mrf.mxu0
    %v130 = vadd.f32 %v110, %v129
    %131 = vdwg.mxu0
    %v132 = vmax.f32 %v130, 0.0
    %v133 = vld [vmem:[#allocation7] sm:$0xff]
    %v134 = vld [vmem:[#allocation7 + $0x8] sm:$0xff]
    %v135 = vld [vmem:[#allocation7 + $0x10] sm:$0xff]
    %v136 = vld [vmem:[#allocation7 + $0x18] sm:$0xff]
    %v137 = vld [vmem:[#allocation7 + $0x20] sm:$0xff]
    %v138 = vld [vmem:[#allocation7 + $0x28] sm:$0xff]
    %v139 = vld [vmem:[#allocation7 + $0x30] sm:$0xff]
    %v140 = vld [vmem:[#allocation7 + $0x38] sm:$0xff]
    %v141 = vld [vmem:[#allocation7 + $0x40] sm:$0xff]
    %v142 = vld [vmem:[#allocation7 + $0x48] sm:$0xff]
    %v143 = vld [vmem:[#allocation7 + $0x50] sm:$0xff]
    %v144 = vld [vmem:[#allocation7 + $0x58] sm:$0xff]
    %v145 = vld [vmem:[#allocation7 + $0x60] sm:$0xff]
    %v146 = vld [vmem:[#allocation7 + $0x68] sm:$0xff]
    %v147 = vld [vmem:[#allocation7 + $0x70] sm:$0xff]
    %v148 = vld [vmem:[#allocation7 + $0x78] sm:$0xff]
    %v149 = vld [vmem:[#allocation7 + $0x80] sm:$0xff]
    %v150 = vld [vmem:[#allocation7 + $0x88] sm:$0xff]
    %v151 = vld [vmem:[#allocation7 + $0x90] sm:$0xff]
    %v152 = vld [vmem:[#allocation7 + $0x98] sm:$0xff]
    %v153 = vld [vmem:[#allocation7 + $0xa0] sm:$0xff]
    %v154 = vld [vmem:[#allocation7 + $0xa8] sm:$0xff]
    %v155 = vld [vmem:[#allocation7 + $0xb0] sm:$0xff]
    %v156 = vld [vmem:[#allocation7 + $0xb8] sm:$0xff]
    %v157 = vld [vmem:[#allocation7 + $0xc0] sm:$0xff]
    %v158 = vld [vmem:[#allocation7 + $0xc8] sm:$0xff]
    %v159 = vld [vmem:[#allocation7 + $0xd0] sm:$0xff]
    %v160 = vld [vmem:[#allocation7 + $0xd8] sm:$0xff]
    %v161 = vld [vmem:[#allocation7 + $0xe0] sm:$0xff]
    %v162 = vld [vmem:[#allocation7 + $0xe8] sm:$0xff]
    %v163 = vld [vmem:[#allocation7 + $0xf0] sm:$0xff]
    %v164 = vld [vmem:[#allocation7 + $0xf8] sm:$0xff]
    %v165 = vld [vmem:[%s4] sm:$0x3]
    %v167 = vperm.slane %v165, 0
    %v168 = vperm.slane %v165, 1
    %171 = vmatpush.msra.mxu0 %v163
    %172 = vmatpush.msra.mxu0 %v161
    %173 = vmatpush.msra.mxu0 %v159
    %174 = vmatpush.msra.mxu0 %v157
    %175 = vmatpush.msra.mxu0 %v155
    %176 = vmatpush.msra.mxu0 %v153
    %177 = vmatpush.msra.mxu0 %v151
    %178 = vmatpush.msra.mxu0 %v149
    %179 = vmatpush.msra.mxu0 %v147
    %180 = vmatpush.msra.mxu0 %v145
    %181 = vmatpush.msra.mxu0 %v143
    %182 = vmatpush.msra.mxu0 %v141
    %183 = vmatpush.msra.mxu0 %v139
    %184 = vmatpush.msra.mxu0 %v137
    %185 = vmatpush.msra.mxu0 %v135
    %186 = vmatpush.msra.mxu0 %v133
    %187 = vmatmul.f32.gmra.mxu0 %v132
    %v188 = vpop.f32.mrf.mxu0
    %v189 = vadd.f32 %v167, %v188
    %190 = vdwg.mxu0
    %191 = vmatpush.msra.mxu0 %v164
    %192 = vmatpush.msra.mxu0 %v162
    %193 = vmatpush.msra.mxu0 %v160
    %194 = vmatpush.msra.mxu0 %v158
    %195 = vmatpush.msra.mxu0 %v156
    %196 = vmatpush.msra.mxu0 %v154
    %197 = vmatpush.msra.mxu0 %v152
    %198 = vmatpush.msra.mxu0 %v150
    %199 = vmatpush.msra.mxu0 %v148
    %200 = vmatpush.msra.mxu0 %v146
    %201 = vmatpush.msra.mxu0 %v144
    %202 = vmatpush.msra.mxu0 %v142
    %203 = vmatpush.msra.mxu0 %v140
    %204 = vmatpush.msra.mxu0 %v138
    %205 = vmatpush.msra.mxu0 %v136
    %206 = vmatpush.msra.mxu0 %v134
    %207 = vmatmul.f32.gmra.mxu0 %v132
    %v208 = vpop.f32.mrf.mxu0
    %v209 = vadd.f32 %v168, %v208
    %210 = vdwg.mxu0
    %v211 = vmax.f32 %v209, 0.0
    %v212 = vld [vmem:[#allocation8] sm:$0xff]
    %v213 = vld [vmem:[#allocation8 + $0x8] sm:$0xff]
    %v214 = vld [vmem:[#allocation8 + $0x10] sm:$0xff]
    %v215 = vld [vmem:[#allocation8 + $0x18] sm:$0xff]
    %v216 = vld [vmem:[#allocation8 + $0x20] sm:$0xff]
    %v217 = vld [vmem:[#allocation8 + $0x28] sm:$0xff]
    %v218 = vld [vmem:[#allocation8 + $0x30] sm:$0xff]
    %v219 = vld [vmem:[#allocation8 + $0x38] sm:$0xff]
    %v220 = vld [vmem:[#allocation8 + $0x40] sm:$0xff]
    %v221 = vld [vmem:[#allocation8 + $0x48] sm:$0xff]
    %v222 = vld [vmem:[#allocation8 + $0x50] sm:$0xff]
    %v223 = vld [vmem:[#allocation8 + $0x58] sm:$0xff]
    %v224 = vld [vmem:[#allocation8 + $0x60] sm:$0xff]
    %v225 = vld [vmem:[#allocation8 + $0x68] sm:$0xff]
    %v226 = vld [vmem:[#allocation8 + $0x70] sm:$0xff]
    %v227 = vld [vmem:[#allocation8 + $0x78] sm:$0xff]
    %v228 = vld [vmem:[%s6] sm:$0x1]
    %v230 = vperm.slane %v228, 0
    %232 = vmatpush.msra.mxu0 %v227
    %233 = vmatpush.msra.mxu0 %v226
    %234 = vmatpush.msra.mxu0 %v225
    %235 = vmatpush.msra.mxu0 %v224
    %236 = vmatpush.msra.mxu0 %v223
    %237 = vmatpush.msra.mxu0 %v222
    %238 = vmatpush.msra.mxu0 %v221
    %239 = vmatpush.msra.mxu0 %v220
    %240 = vmatpush.msra.mxu0 %v219
    %241 = vmatpush.msra.mxu0 %v218
    %242 = vmatpush.msra.mxu0 %v217
    %243 = vmatpush.msra.mxu0 %v216
    %244 = vmatpush.msra.mxu0 %v215
    %245 = vmatpush.msra.mxu0 %v214
    %246 = vmatpush.msra.mxu0 %v213
    %247 = vmatpush.msra.mxu0 %v212
    %248 = vmatmul.f32.gmra.mxu0 %v211
    %v249 = vpop.f32.mrf.mxu0
    %v250 = vadd.f32 %v230, %v249
    %251 = vdwg.mxu0
    %252 = vst [vmem:[#allocation10] sm:$0xff] %v250
    %253 = vst [vmem:[#allocation11] sm:$0xff] %v189
    // Predicated region
    $region46: #{tpu_custom_call.1} parent=1 // pred_check
      _
    $region47: #{tpu_custom_call.1} parent=1 // pred_check_branch
      %255 = sbr.rel (0) target = $region49
    $region48: #{tpu_custom_call.1} parent=1 // pred_region
      %257 = vsyncadd [#allocation4], 0
      %s259 = sshll.u32 [#allocation10], 4
      %s260 = int_to_ptr.vmem [resolvable:$true] %s259
      %s261 = sshll.u32 %s7, 4
      %s262 = int_to_ptr.hbm [resolvable:$true] %s261
      %264 = dma.vmem_to_hbm [thread:$0]  %s260, 128, %s262, [#allocation4]
    $region49: #{tpu_custom_call.1} parent=1 // pred_fallthru
      _
    // Predicated region
    $region50: #{tpu_custom_call.1} parent=1 // pred_check
      _
    $region51: #{tpu_custom_call.1} parent=1 // pred_check_branch
      %266 = sbr.rel (0) target = $region53
    $region52: #{tpu_custom_call.1} parent=1 // pred_region
      %268 = vsyncadd [#allocation12], 0
      %s270 = sshll.u32 [#allocation11], 4
      %s271 = int_to_ptr.vmem [resolvable:$true] %s270
      %s272 = sshll.u32 %s8, 4
      %s273 = int_to_ptr.hbm [resolvable:$true] %s272
      %275 = dma.vmem_to_hbm [thread:$0]  %s271, 128, %s273, [#allocation12]
    $region53: #{tpu_custom_call.1} parent=1 // pred_fallthru
      _
    // Predicated region
    $region54: #{tpu_custom_call.1} parent=1 // pred_check
      _
    $region55: #{tpu_custom_call.1} parent=1 // pred_check_branch
      %277 = sbr.rel (0) target = $region57
    $region56: #{tpu_custom_call.1} parent=1 // pred_region
      %279 = dma.done [#allocation4], 128
    $region57: #{tpu_custom_call.1} parent=1 // pred_fallthru
      _
    // Predicated region
    $region58: #{tpu_custom_call.1} parent=1 // pred_check
      _
    $region59: #{tpu_custom_call.1} parent=1 // pred_check_branch
      %281 = sbr.rel (0) target = $region61
    $region60: #{tpu_custom_call.1} parent=1 // pred_region
      %283 = dma.done [#allocation12], 128
    $region61: #{tpu_custom_call.1} parent=1 // pred_fallthru
      _
    %284 = vsyncpa [#allocation3], 1
    %285 = vsyncpa [#allocation6], 1
    %286 = vsyncpa [#allocation9], 1
    %287 = vsyncpa [#allocation4], 1
    %288 = vsyncpa [#allocation12], 1

// kernel: tpu_custom_call.1
$region0: #{tpu_custom_call.1}
  #allocation0 [shape = 'u32[]', space=smem, size = 0x4, offset = 0x4, fixed_abs, tag = 'smem constant byte address 0x4 - core index']
  #allocation1 [shape = 'u32[72,128]{1,0:T(1,128)}', space=vmem, size = 0x9000, scoped, tag = 'internal scratch']
  %s0 = inlined_call_operand.hbm [shape: f32[8,128], index: 0, kind: input, shape index: {}]
  %s1 = inlined_call_operand.hbm [shape: f32[128,128], index: 1, kind: input, shape index: {}]
  %s2 = inlined_call_operand.vmem [shape: f32[1,128], index: 2, kind: input, shape index: {}]
  %s3 = inlined_call_operand.hbm [shape: f32[128,256], index: 3, kind: input, shape index: {}]
  %s4 = inlined_call_operand.vmem [shape: f32[1,256], index: 4, kind: input, shape index: {}]
  %s5 = inlined_call_operand.hbm [shape: f32[128,128], index: 5, kind: input, shape index: {}]
  %s6 = inlined_call_operand.vmem [shape: f32[1,128], index: 6, kind: input, shape index: {}]
  %s7 = inlined_call_operand.hbm [shape: f32[8,128], index: 7, kind: output, shape index: {0}]
  %s8 = inlined_call_operand.hbm [shape: f32[8,128], index: 8, kind: output, shape index: {1}]
  %9 = xla_tuple %s7, %s8
  %s10 = sld [smem:[#allocation0]]
  $region62: #{tpu_custom_call.1} parent=0
    _
  %s12 = ssub.s32 1, %s10
  %s13 = scalar_select 0, %s12, %s10
  $region1: #{tpu_custom_call.1} parent=0
    #allocation2 [shape = 'u8[4096]{0}', space=vmem, size = 0x1000, scoped, tag = 'input window, operand 0, single buffered']
    #allocation3 [shape = 's32[1]{0}', space=sflag, size = 0x4, scoped, tag = 'scoped memory for tpu_custom_call.1']
    #allocation4 [shape = 's32[1]{0}', space=sflag, size = 0x4, scoped, tag = 'scoped memory for tpu_custom_call.1']
    #allocation5 [shape = 'u8[65536]{0}', space=vmem, size = 0x10000, scoped, tag = 'input window, operand 1, single buffered']
    #allocation6 [shape = 's32[1]{0}', space=sflag, size = 0x4, scoped, tag = 'scoped memory for tpu_custom_call.1']
    #allocation7 [shape = 'u8[131072]{0}', space=vmem, size = 0x20000, scoped, tag = 'input window, operand 3, single buffered']
    #allocation8 [shape = 'u8[65536]{0}', space=vmem, size = 0x10000, scoped, tag = 'input window, operand 5, single buffered']
    #allocation9 [shape = 's32[1]{0}', space=sflag, size = 0x4, scoped, tag = 'scoped memory for tpu_custom_call.1']
    #allocation10 [shape = 'u8[4096]{0}', space=vmem, size = 0x1000, scoped, tag = 'output window, operand 0, single buffered']
    #allocation11 [shape = 'u8[4096]{0}', space=vmem, size = 0x1000, scoped, tag = 'output window, operand 1, single buffered']
    #allocation12 [shape = 's32[1]{0}', space=sflag, size = 0x4, scoped, tag = 'scoped memory for tpu_custom_call.1']
    %14 = vsyncpa [#allocation3], 0
    %15 = vsyncpa [#allocation6], 0
    %16 = vsyncpa [#allocation9], 0
    %17 = vsyncpa [#allocation4], 0
    %18 = vsyncpa [#allocation12], 0
    // Predicated region
    $region2: #{tpu_custom_call.1} parent=1 // pred_check
      _
    $region3: #{tpu_custom_call.1} parent=1 // pred_check_branch
      %20 = sbr.rel (0) target = $region5
    $region4: #{tpu_custom_call.1} parent=1 // pred_region
      %22 = vsyncadd [#allocation3], 0
      %s24 = sshll.u32 %s0, 4
      %s25 = int_to_ptr.hbm [resolvable:$true] %s24
      %s26 = sshll.u32 [#allocation2], 4
      %s27 = int_to_ptr.vmem [resolvable:$true] %s26
      %29 = dma.hbm_to_vmem [thread:$0]  %s25, 128, %s27, [#allocation3]
    $region5: #{tpu_custom_call.1} parent=1 // pred_fallthru
      _
    // Predicated region
    $region6: #{tpu_custom_call.1} parent=1 // pred_check
      _
    $region7: #{tpu_custom_call.1} parent=1 // pred_check_branch
      %31 = sbr.rel (0) target = $region9
    $region8: #{tpu_custom_call.1} parent=1 // pred_region
      %33 = vsyncadd [#allocation6], 0
      %s34 = sshll.u32 %s1, 4
      %s35 = int_to_ptr.hbm [resolvable:$true] %s34
      %s36 = sshll.u32 [#allocation5], 4
      %s37 = int_to_ptr.vmem [resolvable:$true] %s36
      %42 = dma.hbm_to_vmem [thread:$0]  %s35, 2048, %s37, [#allocation6], 128, 128, 8
    $region9: #{tpu_custom_call.1} parent=1 // pred_fallthru
      _
    // Predicated region
    $region10: #{tpu_custom_call.1} parent=1 // pred_check
      _
    $region11: #{tpu_custom_call.1} parent=1 // pred_check_branch
      %44 = sbr.rel (0) target = $region13
    $region12: #{tpu_custom_call.1} parent=1 // pred_region
      _
    $region13: #{tpu_custom_call.1} parent=1 // pred_fallthru
      _
    // Predicated region
    $region14: #{tpu_custom_call.1} parent=1 // pred_check
      _
    $region15: #{tpu_custom_call.1} parent=1 // pred_check_branch
      %46 = sbr.rel (0) target = $region17
    $region16: #{tpu_custom_call.1} parent=1 // pred_region
      %48 = vsyncadd [#allocation6], 0
      %s49 = sshll.u32 %s3, 4
      %s50 = int_to_ptr.hbm [resolvable:$true] %s49
      %s51 = sshll.u32 [#allocation7], 4
      %s52 = int_to_ptr.vmem [resolvable:$true] %s51
      %57 = dma.hbm_to_vmem [thread:$0]  %s50, 4096, %s52, [#allocation6], 256, 256, 16
    $region17: #{tpu_custom_call.1} parent=1 // pred_fallthru
      _
    // Predicated region
    $region18: #{tpu_custom_call.1} parent=1 // pred_check
      _
    $region19: #{tpu_custom_call.1} parent=1 // pred_check_branch
      %59 = sbr.rel (0) target = $region21
    $region20: #{tpu_custom_call.1} parent=1 // pred_region
      _
    $region21: #{tpu_custom_call.1} parent=1 // pred_fallthru
      _
    // Predicated region
    $region22: #{tpu_custom_call.1} parent=1 // pred_check
      _
    $region23: #{tpu_custom_call.1} parent=1 // pred_check_branch
      %61 = sbr.rel (0) target = $region25
    $region24: #{tpu_custom_call.1} parent=1 // pred_region
      %63 = vsyncadd [#allocation9], 0
      %s64 = sshll.u32 %s5, 4
      %s65 = int_to_ptr.hbm [resolvable:$true] %s64
      %s66 = sshll.u32 [#allocation8], 4
      %s67 = int_to_ptr.vmem [resolvable:$true] %s66
      %72 = dma.hbm_to_vmem [thread:$0]  %s65, 2048, %s67, [#allocation9], 128, 128, 8
    $region25: #{tpu_custom_call.1} parent=1 // pred_fallthru
      _
    // Predicated region
    $region26: #{tpu_custom_call.1} parent=1 // pred_check
      _
    $region27: #{tpu_custom_call.1} parent=1 // pred_check_branch
      %74 = sbr.rel (0) target = $region29
    $region28: #{tpu_custom_call.1} parent=1 // pred_region
      _
    $region29: #{tpu_custom_call.1} parent=1 // pred_fallthru
      _
    // Predicated region
    $region30: #{tpu_custom_call.1} parent=1 // pred_check
      _
    $region31: #{tpu_custom_call.1} parent=1 // pred_check_branch
      %76 = sbr.rel (0) target = $region33
    $region32: #{tpu_custom_call.1} parent=1 // pred_region
      %78 = dma.done [#allocation3], 128
    $region33: #{tpu_custom_call.1} parent=1 // pred_fallthru
      _
    // Predicated region
    $region34: #{tpu_custom_call.1} parent=1 // pred_check
      _
    $region35: #{tpu_custom_call.1} parent=1 // pred_check_branch
      %80 = sbr.rel (0) target = $region37
    $region36: #{tpu_custom_call.1} parent=1 // pred_region
      %82 = dma.done [#allocation6], 2048
    $region37: #{tpu_custom_call.1} parent=1 // pred_fallthru
      _
    // Predicated region
    $region38: #{tpu_custom_call.1} parent=1 // pred_check
      _
    $region39: #{tpu_custom_call.1} parent=1 // pred_check_branch
      %84 = sbr.rel (0) target = $region41
    $region40: #{tpu_custom_call.1} parent=1 // pred_region
      %86 = dma.done [#allocation6], 4096
    $region41: #{tpu_custom_call.1} parent=1 // pred_fallthru
      _
    // Predicated region
    $region42: #{tpu_custom_call.1} parent=1 // pred_check
      _
    $region43: #{tpu_custom_call.1} parent=1 // pred_check_branch
      %88 = sbr.rel (0) target = $region45
    $region44: #{tpu_custom_call.1} parent=1 // pred_region
      %90 = dma.done [#allocation9], 2048
    $region45: #{tpu_custom_call.1} parent=1 // pred_fallthru
      _
    %v91 = vld [vmem:[#allocation2] sm:$0xff]
    %v92 = vld [vmem:[#allocation5] sm:$0xff]
    %v93 = vld [vmem:[#allocation5 + $0x8] sm:$0xff]
    %v94 = vld [vmem:[#allocation5 + $0x10] sm:$0xff]
    %v95 = vld [vmem:[#allocation5 + $0x18] sm:$0xff]
    %v96 = vld [vmem:[#allocation5 + $0x20] sm:$0xff]
    %v97 = vld [vmem:[#allocation5 + $0x28] sm:$0xff]
    %v98 = vld [vmem:[#allocation5 + $0x30] sm:$0xff]
    %v99 = vld [vmem:[#allocation5 + $0x38] sm:$0xff]
    %v100 = vld [vmem:[#allocation5 + $0x40] sm:$0xff]
    %v101 = vld [vmem:[#allocation5 + $0x48] sm:$0xff]
    %v102 = vld [vmem:[#allocation5 + $0x50] sm:$0xff]
    %v103 = vld [vmem:[#allocation5 + $0x58] sm:$0xff]
    %v104 = vld [vmem:[#allocation5 + $0x60] sm:$0xff]
    %v105 = vld [vmem:[#allocation5 + $0x68] sm:$0xff]
    %v106 = vld [vmem:[#allocation5 + $0x70] sm:$0xff]
    %v107 = vld [vmem:[#allocation5 + $0x78] sm:$0xff]
    %v108 = vld [vmem:[%s2] sm:$0x1]
    %v110 = vperm.slane %v108, 0
    %112 = vmatpush.msra.mxu0 %v107
    %113 = vmatpush.msra.mxu0 %v106
    %114 = vmatpush.msra.mxu0 %v105
    %115 = vmatpush.msra.mxu0 %v104
    %116 = vmatpush.msra.mxu0 %v103
    %117 = vmatpush.msra.mxu0 %v102
    %118 = vmatpush.msra.mxu0 %v101
    %119 = vmatpush.msra.mxu0 %v100
    %120 = vmatpush.msra.mxu0 %v99
    %121 = vmatpush.msra.mxu0 %v98
    %122 = vmatpush.msra.mxu0 %v97
    %123 = vmatpush.msra.mxu0 %v96
    %124 = vmatpush.msra.mxu0 %v95
    %125 = vmatpush.msra.mxu0 %v94
    %126 = vmatpush.msra.mxu0 %v93
    %127 = vmatpush.msra.mxu0 %v92
    %128 = vmatmul.f32.gmra.mxu0 %v91
    %v129 = vpop.f32.mrf.mxu0
    %v130 = vadd.f32 %v110, %v129
    %131 = vdwg.mxu0
    %v132 = vmax.f32 %v130, 0.0
    %v133 = vld [vmem:[#allocation7] sm:$0xff]
    %v134 = vld [vmem:[#allocation7 + $0x8] sm:$0xff]
    %v135 = vld [vmem:[#allocation7 + $0x10] sm:$0xff]
    %v136 = vld [vmem:[#allocation7 + $0x18] sm:$0xff]
    %v137 = vld [vmem:[#allocation7 + $0x20] sm:$0xff]
    %v138 = vld [vmem:[#allocation7 + $0x28] sm:$0xff]
    %v139 = vld [vmem:[#allocation7 + $0x30] sm:$0xff]
    %v140 = vld [vmem:[#allocation7 + $0x38] sm:$0xff]
    %v141 = vld [vmem:[#allocation7 + $0x40] sm:$0xff]
    %v142 = vld [vmem:[#allocation7 + $0x48] sm:$0xff]
    %v143 = vld [vmem:[#allocation7 + $0x50] sm:$0xff]
    %v144 = vld [vmem:[#allocation7 + $0x58] sm:$0xff]
    %v145 = vld [vmem:[#allocation7 + $0x60] sm:$0xff]
    %v146 = vld [vmem:[#allocation7 + $0x68] sm:$0xff]
    %v147 = vld [vmem:[#allocation7 + $0x70] sm:$0xff]
    %v148 = vld [vmem:[#allocation7 + $0x78] sm:$0xff]
    %v149 = vld [vmem:[#allocation7 + $0x80] sm:$0xff]
    %v150 = vld [vmem:[#allocation7 + $0x88] sm:$0xff]
    %v151 = vld [vmem:[#allocation7 + $0x90] sm:$0xff]
    %v152 = vld [vmem:[#allocation7 + $0x98] sm:$0xff]
    %v153 = vld [vmem:[#allocation7 + $0xa0] sm:$0xff]
    %v154 = vld [vmem:[#allocation7 + $0xa8] sm:$0xff]
    %v155 = vld [vmem:[#allocation7 + $0xb0] sm:$0xff]
    %v156 = vld [vmem:[#allocation7 + $0xb8] sm:$0xff]
    %v157 = vld [vmem:[#allocation7 + $0xc0] sm:$0xff]
    %v158 = vld [vmem:[#allocation7 + $0xc8] sm:$0xff]
    %v159 = vld [vmem:[#allocation7 + $0xd0] sm:$0xff]
    %v160 = vld [vmem:[#allocation7 + $0xd8] sm:$0xff]
    %v161 = vld [vmem:[#allocation7 + $0xe0] sm:$0xff]
    %v162 = vld [vmem:[#allocation7 + $0xe8] sm:$0xff]
    %v163 = vld [vmem:[#allocation7 + $0xf0] sm:$0xff]
    %v164 = vld [vmem:[#allocation7 + $0xf8] sm:$0xff]
    %v165 = vld [vmem:[%s4] sm:$0x3]
    %v167 = vperm.slane %v165, 0
    %v168 = vperm.slane %v165, 1
    %171 = vmatpush.msra.mxu0 %v163
    %172 = vmatpush.msra.mxu0 %v161
    %173 = vmatpush.msra.mxu0 %v159
    %174 = vmatpush.msra.mxu0 %v157
    %175 = vmatpush.msra.mxu0 %v155
    %176 = vmatpush.msra.mxu0 %v153
    %177 = vmatpush.msra.mxu0 %v151
    %178 = vmatpush.msra.mxu0 %v149
    %179 = vmatpush.msra.mxu0 %v147
    %180 = vmatpush.msra.mxu0 %v145
    %181 = vmatpush.msra.mxu0 %v143
    %182 = vmatpush.msra.mxu0 %v141
    %183 = vmatpush.msra.mxu0 %v139
    %184 = vmatpush.msra.mxu0 %v137
    %185 = vmatpush.msra.mxu0 %v135
    %186 = vmatpush.msra.mxu0 %v133
    %187 = vmatmul.f32.gmra.mxu0 %v132
    %v188 = vpop.f32.mrf.mxu0
    %v189 = vadd.f32 %v167, %v188
    %190 = vdwg.mxu0
    %191 = vmatpush.msra.mxu0 %v164
    %192 = vmatpush.msra.mxu0 %v162
    %193 = vmatpush.msra.mxu0 %v160
    %194 = vmatpush.msra.mxu0 %v158
    %195 = vmatpush.msra.mxu0 %v156
    %196 = vmatpush.msra.mxu0 %v154
    %197 = vmatpush.msra.mxu0 %v152
    %198 = vmatpush.msra.mxu0 %v150
    %199 = vmatpush.msra.mxu0 %v148
    %200 = vmatpush.msra.mxu0 %v146
    %201 = vmatpush.msra.mxu0 %v144
    %202 = vmatpush.msra.mxu0 %v142
    %203 = vmatpush.msra.mxu0 %v140
    %204 = vmatpush.msra.mxu0 %v138
    %205 = vmatpush.msra.mxu0 %v136
    %206 = vmatpush.msra.mxu0 %v134
    %207 = vmatmul.f32.gmra.mxu0 %v132
    %v208 = vpop.f32.mrf.mxu0
    %v209 = vadd.f32 %v168, %v208
    %210 = vdwg.mxu0
    %v211 = vmax.f32 %v209, 0.0
    %v212 = vld [vmem:[#allocation8] sm:$0xff]
    %v213 = vld [vmem:[#allocation8 + $0x8] sm:$0xff]
    %v214 = vld [vmem:[#allocation8 + $0x10] sm:$0xff]
    %v215 = vld [vmem:[#allocation8 + $0x18] sm:$0xff]
    %v216 = vld [vmem:[#allocation8 + $0x20] sm:$0xff]
    %v217 = vld [vmem:[#allocation8 + $0x28] sm:$0xff]
    %v218 = vld [vmem:[#allocation8 + $0x30] sm:$0xff]
    %v219 = vld [vmem:[#allocation8 + $0x38] sm:$0xff]
    %v220 = vld [vmem:[#allocation8 + $0x40] sm:$0xff]
    %v221 = vld [vmem:[#allocation8 + $0x48] sm:$0xff]
    %v222 = vld [vmem:[#allocation8 + $0x50] sm:$0xff]
    %v223 = vld [vmem:[#allocation8 + $0x58] sm:$0xff]
    %v224 = vld [vmem:[#allocation8 + $0x60] sm:$0xff]
    %v225 = vld [vmem:[#allocation8 + $0x68] sm:$0xff]
    %v226 = vld [vmem:[#allocation8 + $0x70] sm:$0xff]
    %v227 = vld [vmem:[#allocation8 + $0x78] sm:$0xff]
    %v228 = vld [vmem:[%s6] sm:$0x1]
    %v230 = vperm.slane %v228, 0
    %232 = vmatpush.msra.mxu0 %v227
    %233 = vmatpush.msra.mxu0 %v226
    %234 = vmatpush.msra.mxu0 %v225
    %235 = vmatpush.msra.mxu0 %v224
    %236 = vmatpush.msra.mxu0 %v223
    %237 = vmatpush.msra.mxu0 %v222
    %238 = vmatpush.msra.mxu0 %v221
    %239 = vmatpush.msra.mxu0 %v220
    %240 = vmatpush.msra.mxu0 %v219
    %241 = vmatpush.msra.mxu0 %v218
    %242 = vmatpush.msra.mxu0 %v217
    %243 = vmatpush.msra.mxu0 %v216
    %244 = vmatpush.msra.mxu0 %v215
    %245 = vmatpush.msra.mxu0 %v214
    %246 = vmatpush.msra.mxu0 %v213
    %247 = vmatpush.msra.mxu0 %v212
    %248 = vmatmul.f32.gmra.mxu0 %v211
    %v249 = vpop.f32.mrf.mxu0
    %v250 = vadd.f32 %v230, %v249
    %251 = vdwg.mxu0
    %252 = vst [vmem:[#allocation10] sm:$0xff] %v250
    %253 = vst [vmem:[#allocation11] sm:$0xff] %v189
    // Predicated region
    $region46: #{tpu_custom_call.1} parent=1 // pred_check
      _
    $region47: #{tpu_custom_call.1} parent=1 // pred_check_branch
      %255 = sbr.rel (0) target = $region49
    $region48: #{tpu_custom_call.1} parent=1 // pred_region
      %257 = vsyncadd [#allocation4], 0
      %s259 = sshll.u32 [#allocation10], 4
      %s260 = int_to_ptr.vmem [resolvable:$true] %s259
      %s261 = sshll.u32 %s7, 4
      %s262 = int_to_ptr.hbm [resolvable:$true] %s261
      %264 = dma.vmem_to_hbm [thread:$0]  %s260, 128, %s262, [#allocation4]
    $region49: #{tpu_custom_call.1} parent=1 // pred_fallthru
      _
    // Predicated region
    $region50: #{tpu_custom_call.1} parent=1 // pred_check
      _
    $region51: #{tpu_custom_call.1} parent=1 // pred_check_branch
      %266 = sbr.rel (0) target = $region53
    $region52: #{tpu_custom_call.1} parent=1 // pred_region
      %268 = vsyncadd [#allocation12], 0
      %s270 = sshll.u32 [#allocation11], 4
      %s271 = int_to_ptr.vmem [resolvable:$true] %s270
      %s272 = sshll.u32 %s8, 4
      %s273 = int_to_ptr.hbm [resolvable:$true] %s272
      %275 = dma.vmem_to_hbm [thread:$0]  %s271, 128, %s273, [#allocation12]
    $region53: #{tpu_custom_call.1} parent=1 // pred_fallthru
      _
    // Predicated region
    $region54: #{tpu_custom_call.1} parent=1 // pred_check
      _
    $region55: #{tpu_custom_call.1} parent=1 // pred_check_branch
      %277 = sbr.rel (0) target = $region57
    $region56: #{tpu_custom_call.1} parent=1 // pred_region
      %279 = dma.done [#allocation4], 128
    $region57: #{tpu_custom_call.1} parent=1 // pred_fallthru
      _
    // Predicated region
    $region58: #{tpu_custom_call.1} parent=1 // pred_check
      _
    $region59: #{tpu_custom_call.1} parent=1 // pred_check_branch
      %281 = sbr.rel (0) target = $region61
    $region60: #{tpu_custom_call.1} parent=1 // pred_region
      %283 = dma.done [#allocation12], 128
    $region61: #{tpu_custom_call.1} parent=1 // pred_fallthru
      _
    %284 = vsyncpa [#allocation3], 1
    %285 = vsyncpa [#allocation6], 1
    %286 = vsyncpa [#allocation9], 1
    %287 = vsyncpa [#allocation4], 1
    %288 = vsyncpa [#allocation12], 1

</llo_original>
